<compile_context>
chip_gen: v5e
topology: v5e:2x2
jax: 0.10.0
libtpu: 0.0.40
codegen_flags: <defaults>
</compile_context>

<pallas_src>
import jax
import jax.numpy as jnp
from jax.experimental import pallas as pl
from jax.experimental.pallas import tpu as pltpu


# ---------------------------------------------------------------------------
# Fused Pallas kernel (one grid step == one sample): GCN x2 -> FFNN head
# ---------------------------------------------------------------------------
def lower_net_kernel(x_ref, adj_ref, vnr_ref,
                     w1_ref, b1_ref, w2_ref, b2_ref,
                     wf1n_ref, wf1v_ref, bf1_ref,
                     wf2_ref, bf2_ref,
                     out_ref):
    adj = adj_ref[...]
    cdt = adj.dtype            # compute dtype (f32 default, bf16 opt-in); acc f32

    def gcn_layer(x, w_ref, b_ref):
        """relu((A+I) @ x @ W + b); cheaper matmul association picked statically."""
        w = w_ref[...]
        if x.shape[1] <= w.shape[1]:
            ax = jnp.dot(adj, x, preferred_element_type=jnp.float32)
            h = jnp.dot(ax.astype(cdt), w, preferred_element_type=jnp.float32)
        else:
            xw = jnp.dot(x, w, preferred_element_type=jnp.float32)
            h = jnp.dot(adj, xw.astype(cdt), preferred_element_type=jnp.float32)
        return jnp.maximum(h + b_ref[...], 0.0)

    h1 = gcn_layer(x_ref[...], w1_ref, b1_ref)          # (n, g1_hidden) f32
    h2 = gcn_layer(h1.astype(cdt), w2_ref, b2_ref)       # (n, g1_out)    f32

    # ---- FFNN layer 1: one contraction over the flattened node features ----
    # Row-major flatten of h2 (matches torch .flatten()) built as a lane-axis
    # concat of the rows (sublane->lane move on the XLU/VPU, no reshape crossing
    # the (8,128) tile), then a single (1, n*g1_out) x (n*g1_out, ff) matmul.
    n_nodes = h2.shape[0]
    h2c = h2.astype(cdt)
    h2_flat = jnp.concatenate([h2c[i:i + 1, :] for i in range(n_nodes)], axis=1)

    acc = jnp.dot(h2_flat, wf1n_ref[...], preferred_element_type=jnp.float32)
    acc = acc + jnp.dot(vnr_ref[...], wf1v_ref[...],
                        preferred_element_type=jnp.float32)
    h = jnp.tanh(acc + bf1_ref[...])                      # (1, ff_hidden) f32

    # ---- FFNN layer 2 ----
    out = jnp.dot(h.astype(cdt), wf2_ref[...],
                  preferred_element_type=jnp.float32) + bf2_ref[...]
    out_ref[0] = out                                      # out_ref: (1, 1, C)


# ---------------------------------------------------------------------------
# Helpers
# ---------------------------------------------------------------------------
def remake_adj(edge_index, num_nodes):
    """Dense adjacency from edge_index, plus self-loops (A + I), as in the spec."""
    src, dst = edge_index[0], edge_index[1]
    adj = jnp.zeros((num_nodes, num_nodes), jnp.float32)
    adj = adj.at[src, dst].set(1.0)
    adj = adj + jnp.eye(num_nodes, dtype=jnp.float32)
    return adj


def _maybe_vmem_limit_bytes(vmem_need_bytes):
    """Generation-aware scoped-VMEM limit; None if the default limit suffices."""
    if vmem_need_bytes <= (12 << 20):      # comfortably under v5e's 16 MiB default
        return None
    try:
        cap = int(pltpu.get_tpu_info().vmem_capacity_bytes)
    except Exception:                      # pragma: no cover - fallback if query fails
        cap = 64 << 20                     # conservative: v7x physical per-TC VMEM
    return int(min(vmem_need_bytes + (4 << 20), int(0.8 * cap)))


# ---------------------------------------------------------------------------
# Wrappers
# ---------------------------------------------------------------------------
def lower_network_forward_batched(sub_x_b, adj_b, vnr_b, params,
                                  compute_dtype=jnp.float32):
    """Fused forward over a batch of (sub_x, adj, vnr) samples.

    sub_x_b: (B, n_nodes, g1_in); adj_b: (B, n_nodes, n_nodes) (already A + I);
    vnr_b: (B, vnr_len).  Returns (B, num_classes).
    """
    B, n_nodes, g1_in = sub_x_b.shape
    g1_hidden = params["w1"].shape[1]
    g1_out = params["w2"].shape[1]
    ff_hidden = params["wf1"].shape[1]
    num_classes = params["wf2"].shape[1]
    vnr_len = vnr_b.shape[1]
    node_feats = n_nodes * g1_out
    assert params["wf1"].shape[0] == node_feats + vnr_len
    assert adj_b.shape == (B, n_nodes, n_nodes)

    cdt = compute_dtype

    # Split Wf1 at trace time (free). Node part stays 2D (node_feats, ff_hidden)
    # -> one lane-dense contraction in-kernel; vnr part is (vnr_len, ff_hidden).
    wf1_nodes = params["wf1"][:node_feats]
    wf1_vnr = params["wf1"][node_feats:]

    inputs = (
        sub_x_b.astype(cdt),                        # (B, n, g1_in)
        adj_b.astype(cdt),                          # (B, n, n)
        vnr_b.reshape(B, 1, vnr_len).astype(cdt),   # (B, 1, vnr_len)
        params["w1"].astype(cdt), params["b1"].astype(jnp.float32),
        params["w2"].astype(cdt), params["b2"].astype(jnp.float32),
        wf1_nodes.astype(cdt), wf1_vnr.astype(cdt),
        params["bf1"].astype(jnp.float32),
        params["wf2"].astype(cdt), params["bf2"].astype(jnp.float32),
    )

    # Per-sample blocks (batch dim squeezed in-kernel); weights get a constant
    # block index so they are fetched once and stay resident across the grid.
    bmap = lambda b: (b, 0, 0)
    wmap = lambda b: (0, 0)
    in_specs = [
        pl.BlockSpec((None, n_nodes, g1_in), bmap),
        pl.BlockSpec((None, n_nodes, n_nodes), bmap),
        pl.BlockSpec((None, 1, vnr_len), bmap),
        pl.BlockSpec((g1_in, g1_hidden), wmap),
        pl.BlockSpec((1, g1_hidden), wmap),
        pl.BlockSpec((g1_hidden, g1_out), wmap),
        pl.BlockSpec((1, g1_out), wmap),
        pl.BlockSpec((node_feats, ff_hidden), wmap),
        pl.BlockSpec((vnr_len, ff_hidden), wmap),
        pl.BlockSpec((1, ff_hidden), wmap),
        pl.BlockSpec((ff_hidden, num_classes), wmap),
        pl.BlockSpec((1, num_classes), wmap),
    ]
    out_specs = pl.BlockSpec((1, 1, num_classes), bmap)
    out_shape = jax.ShapeDtypeStruct((B, 1, num_classes), jnp.float32)

    # Advisory cost estimate so XLA schedules around this small custom call.
    flops_per_sample = 2 * (
        n_nodes * n_nodes * min(g1_in, g1_hidden) + n_nodes * g1_in * g1_hidden
        + n_nodes * g1_hidden * g1_out + n_nodes * n_nodes * min(g1_hidden, g1_out)
        + (node_feats + vnr_len) * ff_hidden
        + ff_hidden * num_classes)
    bytes_accessed = (sum(int(a.size) * a.dtype.itemsize for a in inputs)
                      + B * num_classes * 4)
    cost = pl.CostEstimate(flops=int(B * flops_per_sample),
                           transcendentals=int(B * ff_hidden),
                           bytes_accessed=int(bytes_accessed))

    # Scoped VMEM: resident weights + double-buffered per-sample blocks/output.
    itemsize = jnp.dtype(cdt).itemsize
    weight_bytes = sum(int(a.size) * a.dtype.itemsize for a in inputs[3:])
    sample_block_bytes = (n_nodes * g1_in + n_nodes * n_nodes + vnr_len) * itemsize
    vmem_need = weight_bytes + 2 * sample_block_bytes + 2 * num_classes * 4
    cp_kwargs = dict(dimension_semantics=("parallel",))
    limit = _maybe_vmem_limit_bytes(vmem_need)
    if limit is not None:
        cp_kwargs["vmem_limit_bytes"] = limit

    out = pl.pallas_call(
        lower_net_kernel,
        grid=(B,),
        out_shape=out_shape,
        in_specs=in_specs,
        out_specs=out_specs,
        cost_estimate=cost,
        compiler_params=pltpu.CompilerParams(**cp_kwargs),
    )(*inputs)
    # TODO(synk): (B, num_classes) with num_classes=4 is still a lane-sparse
    # store; pack several samples per output slab if this ever shows up in traces.
    return out[:, 0, :]


def lower_network_forward(sub_x, edge_index, vnr_data, params,
                          compute_dtype=jnp.float32):
    """Single-sample forward (matches the PyTorch module): returns (1, num_classes)."""
    n_nodes = sub_x.shape[0]
    adj = remake_adj(edge_index, n_nodes)
    return lower_network_forward_batched(sub_x[None], adj[None], vnr_data[None],
                                         params, compute_dtype=compute_dtype)


# ---------------------------------------------------------------------------
# Pure-JAX reference (mirrors the PyTorch forward) for a correctness check
# ---------------------------------------------------------------------------
def lower_network_reference(sub_x, adj, vnr_data, params):
    h1 = jnp.maximum(adj @ sub_x @ params["w1"] + params["b1"], 0.0)
    h2 = jnp.maximum(adj @ h1 @ params["w2"] + params["b2"], 0.0)
    flat = jnp.concatenate([h2.reshape(-1), vnr_data])[None, :]
    h = jnp.tanh(flat @ params["wf1"] + params["bf1"])
    return h @ params["wf2"] + params["bf2"]


# ---------------------------------------------------------------------------
# Deterministic parameter init + demo
# ---------------------------------------------------------------------------
def init_params(key, g1_in, g1_hidden, g1_out, ff_hidden, num_classes,
                num_ffnn_features):
    ks = jax.random.split(key, 8)

    def w(k, shape):
        return jax.random.normal(k, shape, jnp.float32) * 0.1

    return {
        "w1":  w(ks[0], (g1_in, g1_hidden)),
        "b1":  w(ks[1], (1, g1_hidden)),
        "w2":  w(ks[2], (g1_hidden, g1_out)),
        "b2":  w(ks[3], (1, g1_out)),
        "wf1": w(ks[4], (num_ffnn_features, ff_hidden)),
        "bf1": w(ks[5], (1, ff_hidden)),
        "wf2": w(ks[6], (ff_hidden, num_classes)),
        "bf2": w(ks[7], (1, num_classes)),
    }


if __name__ == "__main__":
    # Small, self-consistent shapes; B=2 samples batched through one pallas_call.
    B           = 2
    n_nodes     = 8
    g1_in       = 4
    g1_hidden   = 16
    g1_out      = 8
    vnr_len     = 16
    num_ffnn    = n_nodes * g1_out + vnr_len   # 80
    ff_hidden   = 32
    num_classes = 4

    key = jax.random.PRNGKey(0)
    k_x, k_v, k_p = jax.random.split(key, 3)

    sub_x_b = jax.random.normal(k_x, (B, n_nodes, g1_in), jnp.float32)
    vnr_b = jax.random.normal(k_v, (B, vnr_len), jnp.float32)

    # Two different circulant graphs (both directions; self-loops in remake_adj).
    src = jnp.arange(n_nodes, dtype=jnp.int32)
    edge_indices = []
    for shift in (1, 3):
        dst = (src + shift) % n_nodes
        edge_indices.append(jnp.stack(
            [jnp.concatenate([src, dst]), jnp.concatenate([dst, src])], axis=0))
    adj_b = jnp.stack([remake_adj(ei, n_nodes) for ei in edge_indices], axis=0)

    params = init_params(k_p, g1_in, g1_hidden, g1_out, ff_hidden,
                         num_classes, num_ffnn)

    # Batched fused kernel (grid over samples).
    out = jax.block_until_ready(
        lower_network_forward_batched(sub_x_b, adj_b, vnr_b, params))
    assert out.shape == (B, num_classes)
    assert jnp.all(jnp.isfinite(out))
    for b in range(B):
        ref = lower_network_reference(sub_x_b[b], adj_b[b], vnr_b[b], params)
        assert jnp.allclose(out[b:b + 1], ref, rtol=1e-3, atol=1e-3)

    # Single-sample path (module semantics: (1, num_classes)).
    out1 = jax.block_until_ready(
        lower_network_forward(sub_x_b[0], edge_indices[0], vnr_b[0], params))
    ref1 = lower_network_reference(sub_x_b[0], adj_b[0], vnr_b[0], params)
    assert out1.shape == (1, num_classes)
    assert jnp.allclose(out1, ref1, rtol=1e-3, atol=1e-3)

    print("KERNEL_OK")
</pallas_src>

<mosaic_0001>
module attributes {stable_mosaic.version = 11 : i64} {
  func.func @lower_net_kernel(%arg0: i32, %arg1: memref<1x8x4xf32, #tpu.memory_space<vmem>>, %arg2: memref<1x8x8xf32, #tpu.memory_space<vmem>>, %arg3: memref<1x1x16xf32, #tpu.memory_space<vmem>>, %arg4: memref<4x16xf32, #tpu.memory_space<vmem>>, %arg5: memref<1x16xf32, #tpu.memory_space<vmem>>, %arg6: memref<16x8xf32, #tpu.memory_space<vmem>>, %arg7: memref<1x8xf32, #tpu.memory_space<vmem>>, %arg8: memref<64x32xf32, #tpu.memory_space<vmem>>, %arg9: memref<16x32xf32, #tpu.memory_space<vmem>>, %arg10: memref<1x32xf32, #tpu.memory_space<vmem>>, %arg11: memref<32x4xf32, #tpu.memory_space<vmem>>, %arg12: memref<1x4xf32, #tpu.memory_space<vmem>>, %arg13: memref<1x1x4xf32, #tpu.memory_space<vmem>>) attributes {dimension_semantics = [#tpu.dimension_semantics<parallel>], iteration_bounds = array<i64: 2>, scalar_prefetch = 0 : i64, scratch_operands = 0 : i64, tpu.core_type = #tpu.core_type<tc>, window_params = [{transform_indices = @transform_0, window_bounds = array<i64: 1, 8, 4>}, {transform_indices = @transform_1, window_bounds = array<i64: 1, 8, 8>}, {transform_indices = @transform_2, window_bounds = array<i64: 1, 1, 16>}, {pipeline_mode = #tpu.pipeline_mode<synchronous>, transform_indices = @transform_3, window_bounds = array<i64: 4, 16>}, {pipeline_mode = #tpu.pipeline_mode<synchronous>, transform_indices = @transform_4, window_bounds = array<i64: 1, 16>}, {pipeline_mode = #tpu.pipeline_mode<synchronous>, transform_indices = @transform_5, window_bounds = array<i64: 16, 8>}, {pipeline_mode = #tpu.pipeline_mode<synchronous>, transform_indices = @transform_6, window_bounds = array<i64: 1, 8>}, {pipeline_mode = #tpu.pipeline_mode<synchronous>, transform_indices = @transform_7, window_bounds = array<i64: 64, 32>}, {pipeline_mode = #tpu.pipeline_mode<synchronous>, transform_indices = @transform_8, window_bounds = array<i64: 16, 32>}, {pipeline_mode = #tpu.pipeline_mode<synchronous>, transform_indices = @transform_9, window_bounds = array<i64: 1, 32>}, {pipeline_mode = #tpu.pipeline_mode<synchronous>, transform_indices = @transform_10, window_bounds = array<i64: 32, 4>}, {pipeline_mode = #tpu.pipeline_mode<synchronous>, transform_indices = @transform_11, window_bounds = array<i64: 1, 4>}, {transform_indices = @transform_12, window_bounds = array<i64: 1, 1, 4>}]} {
    %c0 = arith.constant 0 : index
    %c0_0 = arith.constant 0 : index
    %c0_1 = arith.constant 0 : index
    %0 = vector.load %arg2[%c0, %c0_0, %c0_1] : memref<1x8x8xf32, #tpu.memory_space<vmem>>, vector<1x8x8xf32>
    %1 = vector.shape_cast %0 : vector<1x8x8xf32> to vector<8x8xf32>
    %c0_2 = arith.constant 0 : index
    %c0_3 = arith.constant 0 : index
    %c0_4 = arith.constant 0 : index
    %2 = vector.load %arg1[%c0_2, %c0_3, %c0_4] : memref<1x8x4xf32, #tpu.memory_space<vmem>>, vector<1x8x4xf32>
    %3 = vector.shape_cast %2 : vector<1x8x4xf32> to vector<8x4xf32>
    %c0_5 = arith.constant 0 : index
    %c0_6 = arith.constant 0 : index
    %4 = vector.load %arg4[%c0_5, %c0_6] : memref<4x16xf32, #tpu.memory_space<vmem>>, vector<4x16xf32>
    %cst = arith.constant dense<0.000000e+00> : vector<8x4xf32>
    %5 = tpu.matmul %1, %3, %cst {dimension_numbers = #tpu.dot_dimension_numbers<[1], [0], [0], [1], [0, 0, 1, 1], [], []>} : vector<8x8xf32>, vector<8x4xf32>, vector<8x4xf32> -> vector<8x4xf32>
    %cst_7 = arith.constant dense<0.000000e+00> : vector<8x16xf32>
    %6 = tpu.matmul %5, %4, %cst_7 {dimension_numbers = #tpu.dot_dimension_numbers<[1], [0], [0], [1], [0, 0, 1, 1], [], []>} : vector<8x4xf32>, vector<4x16xf32>, vector<8x16xf32> -> vector<8x16xf32>
    %c0_8 = arith.constant 0 : index
    %c0_9 = arith.constant 0 : index
    %7 = vector.load %arg5[%c0_8, %c0_9] : memref<1x16xf32, #tpu.memory_space<vmem>>, vector<1x16xf32>
    %8 = vector.broadcast %7 : vector<1x16xf32> to vector<8x16xf32>
    %9 = arith.addf %6, %8 : vector<8x16xf32>
    %cst_10 = arith.constant 0.000000e+00 : f32
    %10 = vector.broadcast %cst_10 : f32 to vector<8x16xf32>
    %11 = arith.maximumf %9, %10 : vector<8x16xf32>
    %c0_11 = arith.constant 0 : index
    %c0_12 = arith.constant 0 : index
    %12 = vector.load %arg6[%c0_11, %c0_12] : memref<16x8xf32, #tpu.memory_space<vmem>>, vector<16x8xf32>
    %cst_13 = arith.constant dense<0.000000e+00> : vector<8x8xf32>
    %13 = tpu.matmul %11, %12, %cst_13 {dimension_numbers = #tpu.dot_dimension_numbers<[1], [0], [0], [1], [0, 0, 1, 1], [], []>} : vector<8x16xf32>, vector<16x8xf32>, vector<8x8xf32> -> vector<8x8xf32>
    %cst_14 = arith.constant dense<0.000000e+00> : vector<8x8xf32>
    %14 = tpu.matmul %1, %13, %cst_14 {dimension_numbers = #tpu.dot_dimension_numbers<[1], [0], [0], [1], [0, 0, 1, 1], [], []>} : vector<8x8xf32>, vector<8x8xf32>, vector<8x8xf32> -> vector<8x8xf32>
    %c0_15 = arith.constant 0 : index
    %c0_16 = arith.constant 0 : index
    %15 = vector.load %arg7[%c0_15, %c0_16] : memref<1x8xf32, #tpu.memory_space<vmem>>, vector<1x8xf32>
    %16 = vector.broadcast %15 : vector<1x8xf32> to vector<8x8xf32>
    %17 = arith.addf %14, %16 : vector<8x8xf32>
    %cst_17 = arith.constant 0.000000e+00 : f32
    %18 = vector.broadcast %cst_17 : f32 to vector<8x8xf32>
    %19 = arith.maximumf %17, %18 : vector<8x8xf32>
    %20 = vector.extract_strided_slice %19 {offsets = [0, 0], sizes = [1, 8], strides = [1, 1]} : vector<8x8xf32> to vector<1x8xf32>
    %21 = vector.extract_strided_slice %19 {offsets = [1, 0], sizes = [1, 8], strides = [1, 1]} : vector<8x8xf32> to vector<1x8xf32>
    %22 = vector.extract_strided_slice %19 {offsets = [2, 0], sizes = [1, 8], strides = [1, 1]} : vector<8x8xf32> to vector<1x8xf32>
    %23 = vector.extract_strided_slice %19 {offsets = [3, 0], sizes = [1, 8], strides = [1, 1]} : vector<8x8xf32> to vector<1x8xf32>
    %24 = vector.extract_strided_slice %19 {offsets = [4, 0], sizes = [1, 8], strides = [1, 1]} : vector<8x8xf32> to vector<1x8xf32>
    %25 = vector.extract_strided_slice %19 {offsets = [5, 0], sizes = [1, 8], strides = [1, 1]} : vector<8x8xf32> to vector<1x8xf32>
    %26 = vector.extract_strided_slice %19 {offsets = [6, 0], sizes = [1, 8], strides = [1, 1]} : vector<8x8xf32> to vector<1x8xf32>
    %27 = vector.extract_strided_slice %19 {offsets = [7, 0], sizes = [1, 8], strides = [1, 1]} : vector<8x8xf32> to vector<1x8xf32>
    %28 = tpu.concatenate %20, %21, %22, %23, %24, %25, %26, %27 in 1 : vector<1x8xf32>, vector<1x8xf32>, vector<1x8xf32>, vector<1x8xf32>, vector<1x8xf32>, vector<1x8xf32>, vector<1x8xf32>, vector<1x8xf32> -> vector<1x64xf32>
    %c0_18 = arith.constant 0 : index
    %c0_19 = arith.constant 0 : index
    %29 = vector.load %arg8[%c0_18, %c0_19] : memref<64x32xf32, #tpu.memory_space<vmem>>, vector<64x32xf32>
    %cst_20 = arith.constant dense<0.000000e+00> : vector<1x32xf32>
    %30 = tpu.matmul %28, %29, %cst_20 {dimension_numbers = #tpu.dot_dimension_numbers<[1], [0], [0], [1], [0, 0, 1, 1], [], []>} : vector<1x64xf32>, vector<64x32xf32>, vector<1x32xf32> -> vector<1x32xf32>
    %c0_21 = arith.constant 0 : index
    %c0_22 = arith.constant 0 : index
    %c0_23 = arith.constant 0 : index
    %31 = vector.load %arg3[%c0_21, %c0_22, %c0_23] : memref<1x1x16xf32, #tpu.memory_space<vmem>>, vector<1x1x16xf32>
    %32 = vector.shape_cast %31 : vector<1x1x16xf32> to vector<1x16xf32>
    %c0_24 = arith.constant 0 : index
    %c0_25 = arith.constant 0 : index
    %33 = vector.load %arg9[%c0_24, %c0_25] : memref<16x32xf32, #tpu.memory_space<vmem>>, vector<16x32xf32>
    %cst_26 = arith.constant dense<0.000000e+00> : vector<1x32xf32>
    %34 = tpu.matmul %32, %33, %cst_26 {dimension_numbers = #tpu.dot_dimension_numbers<[1], [0], [0], [1], [0, 0, 1, 1], [], []>} : vector<1x16xf32>, vector<16x32xf32>, vector<1x32xf32> -> vector<1x32xf32>
    %35 = arith.addf %30, %34 : vector<1x32xf32>
    %c0_27 = arith.constant 0 : index
    %c0_28 = arith.constant 0 : index
    %36 = vector.load %arg10[%c0_27, %c0_28] : memref<1x32xf32, #tpu.memory_space<vmem>>, vector<1x32xf32>
    %37 = arith.addf %35, %36 : vector<1x32xf32>
    %38 = math.tanh %37 : vector<1x32xf32>
    %c0_29 = arith.constant 0 : index
    %c0_30 = arith.constant 0 : index
    %39 = vector.load %arg11[%c0_29, %c0_30] : memref<32x4xf32, #tpu.memory_space<vmem>>, vector<32x4xf32>
    %cst_31 = arith.constant dense<0.000000e+00> : vector<1x4xf32>
    %40 = tpu.matmul %38, %39, %cst_31 {dimension_numbers = #tpu.dot_dimension_numbers<[1], [0], [0], [1], [0, 0, 1, 1], [], []>} : vector<1x32xf32>, vector<32x4xf32>, vector<1x4xf32> -> vector<1x4xf32>
    %c0_32 = arith.constant 0 : index
    %c0_33 = arith.constant 0 : index
    %41 = vector.load %arg12[%c0_32, %c0_33] : memref<1x4xf32, #tpu.memory_space<vmem>>, vector<1x4xf32>
    %42 = arith.addf %40, %41 : vector<1x4xf32>
    %c0_34 = arith.constant 0 : index
    %c0_35 = arith.constant 0 : index
    %c0_36 = arith.constant 0 : index
    %43 = vector.load %arg13[%c0_34, %c0_35, %c0_36] : memref<1x1x4xf32, #tpu.memory_space<vmem>>, vector<1x1x4xf32>
    %44 = vector.shape_cast %43 : vector<1x1x4xf32> to vector<1x4xf32>
    %45 = vector.shape_cast %42 : vector<1x4xf32> to vector<1x1x4xf32>
    tpu.vector_store %arg13[%c0_34, %c0_35, %c0_36], %45 {strides = array<i32>} : memref<1x1x4xf32, #tpu.memory_space<vmem>>, vector<1x1x4xf32>,
    return
  }
  func.func @transform_0(%arg0: i32) -> (i32, i32, i32) {
    %c0_i32 = arith.constant 0 : i32
    %c0_i32_0 = arith.constant 0 : i32
    %c0_i32_1 = arith.constant 0 : i32
    return %arg0, %c0_i32, %c0_i32_0 : i32, i32, i32
  }
  func.func @transform_1(%arg0: i32) -> (i32, i32, i32) {
    %c0_i32 = arith.constant 0 : i32
    %c0_i32_0 = arith.constant 0 : i32
    %c0_i32_1 = arith.constant 0 : i32
    return %arg0, %c0_i32, %c0_i32_0 : i32, i32, i32
  }
  func.func @transform_2(%arg0: i32) -> (i32, i32, i32) {
    %c0_i32 = arith.constant 0 : i32
    %c0_i32_0 = arith.constant 0 : i32
    %c0_i32_1 = arith.constant 0 : i32
    return %arg0, %c0_i32, %c0_i32_0 : i32, i32, i32
  }
  func.func @transform_3(%arg0: i32) -> (i32, i32) {
    %c0_i32 = arith.constant 0 : i32
    %c0_i32_0 = arith.constant 0 : i32
    %c0_i32_1 = arith.constant 0 : i32
    return %c0_i32, %c0_i32_0 : i32, i32
  }
  func.func @transform_4(%arg0: i32) -> (i32, i32) {
    %c0_i32 = arith.constant 0 : i32
    %c0_i32_0 = arith.constant 0 : i32
    %c0_i32_1 = arith.constant 0 : i32
    return %c0_i32, %c0_i32_0 : i32, i32
  }
  func.func @transform_5(%arg0: i32) -> (i32, i32) {
    %c0_i32 = arith.constant 0 : i32
    %c0_i32_0 = arith.constant 0 : i32
    %c0_i32_1 = arith.constant 0 : i32
    return %c0_i32, %c0_i32_0 : i32, i32
  }
  func.func @transform_6(%arg0: i32) -> (i32, i32) {
    %c0_i32 = arith.constant 0 : i32
    %c0_i32_0 = arith.constant 0 : i32
    %c0_i32_1 = arith.constant 0 : i32
    return %c0_i32, %c0_i32_0 : i32, i32
  }
  func.func @transform_7(%arg0: i32) -> (i32, i32) {
    %c0_i32 = arith.constant 0 : i32
    %c0_i32_0 = arith.constant 0 : i32
    %c0_i32_1 = arith.constant 0 : i32
    return %c0_i32, %c0_i32_0 : i32, i32
  }
  func.func @transform_8(%arg0: i32) -> (i32, i32) {
    %c0_i32 = arith.constant 0 : i32
    %c0_i32_0 = arith.constant 0 : i32
    %c0_i32_1 = arith.constant 0 : i32
    return %c0_i32, %c0_i32_0 : i32, i32
  }
  func.func @transform_9(%arg0: i32) -> (i32, i32) {
    %c0_i32 = arith.constant 0 : i32
    %c0_i32_0 = arith.constant 0 : i32
    %c0_i32_1 = arith.constant 0 : i32
    return %c0_i32, %c0_i32_0 : i32, i32
  }
  func.func @transform_10(%arg0: i32) -> (i32, i32) {
    %c0_i32 = arith.constant 0 : i32
    %c0_i32_0 = arith.constant 0 : i32
    %c0_i32_1 = arith.constant 0 : i32
    return %c0_i32, %c0_i32_0 : i32, i32
  }
  func.func @transform_11(%arg0: i32) -> (i32, i32) {
    %c0_i32 = arith.constant 0 : i32
    %c0_i32_0 = arith.constant 0 : i32
    %c0_i32_1 = arith.constant 0 : i32
    return %c0_i32, %c0_i32_0 : i32, i32
  }
  func.func @transform_12(%arg0: i32) -> (i32, i32, i32) {
    %c0_i32 = arith.constant 0 : i32
    %c0_i32_0 = arith.constant 0 : i32
    %c0_i32_1 = arith.constant 0 : i32
    return %arg0, %c0_i32, %c0_i32_0 : i32, i32, i32
  }
}

</mosaic_0001>

<llo_original>
// kernel: tpu_custom_call.1
$region0: #{tpu_custom_call.1}
  #allocation0 [shape = 'u32[]', space=smem, size = 0x4, offset = 0x4, fixed_abs, tag = 'smem constant byte address 0x4 - core index']
  #allocation1 [shape = 'u32[72,128]{1,0:T(1,128)}', space=vmem, size = 0x9000, scoped, tag = 'internal scratch']
  %s0 = inlined_call_operand.vmem [shape: f32[2,8,4], index: 0, kind: input, shape index: {}]
  %s1 = inlined_call_operand.vmem [shape: f32[2,8,8], index: 1, kind: input, shape index: {}]
  %s2 = inlined_call_operand.vmem [shape: f32[2,1,16], index: 2, kind: input, shape index: {}]
  %s3 = inlined_call_operand.vmem [shape: f32[4,16], index: 3, kind: input, shape index: {}]
  %s4 = inlined_call_operand.vmem [shape: f32[1,16], index: 4, kind: input, shape index: {}]
  %s5 = inlined_call_operand.vmem [shape: f32[16,8], index: 5, kind: input, shape index: {}]
  %s6 = inlined_call_operand.vmem [shape: f32[1,8], index: 6, kind: input, shape index: {}]
  %s7 = inlined_call_operand.vmem [shape: f32[64,32], index: 7, kind: input, shape index: {}]
  %s8 = inlined_call_operand.vmem [shape: f32[16,32], index: 8, kind: input, shape index: {}]
  %s9 = inlined_call_operand.vmem [shape: f32[1,32], index: 9, kind: input, shape index: {}]
  %s10 = inlined_call_operand.vmem [shape: f32[32,4], index: 10, kind: input, shape index: {}]
  %s11 = inlined_call_operand.vmem [shape: f32[1,4], index: 11, kind: input, shape index: {}]
  %s12 = inlined_call_operand.hbm [shape: f32[2,1,4], index: 12, kind: output, shape index: {}]
  %s13 = sld [smem:[#allocation0]]
  $region81: #{tpu_custom_call.1} parent=0
    _
  %s15 = ssub.s32 1, %s13
  %s16 = scalar_select 0, %s15, %s13
  $region1: #{tpu_custom_call.1} parent=0
    #allocation2 [shape = 'u8[1024]{0}', space=vmem, size = 0x400, scoped, tag = 'output window, operand 0']
    #allocation3 [shape = 's32[2]{0}', space=sflag, size = 0x8, scoped, tag = 'scoped memory for tpu_custom_call.1']
    %17 = vsyncpa [#allocation3], 0
    %s18 = scalar_lea.sflag [#allocation3], 1
    %19 = vsyncpa %s18, 0
    loop: start=0, step=1, limit=4
    $region2: #{tpu_custom_call.1} parent=1 // loop_pre_header
      _
    $region3: #{tpu_custom_call.1} parent=1 // loop_header
      %s21 = sphi 0, %s25
      %p22 = scmp.ge.s32.totalorder %s21, 4
      %s31 = sphi 0, %s33
      %s34 = sphi 0, %s31
      %s35 = sphi 0, %s34
      %s51 = sphi 0, %s35
      %s57 = sphi 0, %s59
      %s60 = sphi 0, %s57
      %s61 = sphi 0, %s60
      %s77 = sphi 0, %s61
      %s83 = sphi 0, %s85
      %s86 = sphi 0, %s83
      %s87 = sphi 0, %s86
      %s103 = sphi 0, %s87
      %s107 = sphi 0, %s107
      %s109 = sphi 0, %s107
      %s110 = sphi 0, %s109
      %s124 = sphi 0, %s110
      %s128 = sphi 0, %s128
      %s130 = sphi 0, %s128
      %s131 = sphi 0, %s130
      %s145 = sphi 0, %s131
      %s149 = sphi 0, %s149
      %s151 = sphi 0, %s149
      %s152 = sphi 0, %s151
      %s166 = sphi 0, %s152
      %s170 = sphi 0, %s170
      %s172 = sphi 0, %s170
      %s173 = sphi 0, %s172
      %s187 = sphi 0, %s173
      %s191 = sphi 0, %s191
      %s193 = sphi 0, %s191
      %s194 = sphi 0, %s193
      %s208 = sphi 0, %s194
      %s212 = sphi 0, %s212
      %s214 = sphi 0, %s212
      %s215 = sphi 0, %s214
      %s229 = sphi 0, %s215
      %s233 = sphi 0, %s233
      %s235 = sphi 0, %s233
      %s236 = sphi 0, %s235
      %s250 = sphi 0, %s236
      %s254 = sphi 0, %s254
      %s256 = sphi 0, %s254
      %s257 = sphi 0, %s256
      %s271 = sphi 0, %s257
      %s275 = sphi 0, %s275
      %s277 = sphi 0, %s275
      %s278 = sphi 0, %s277
      %s292 = sphi 0, %s278
      %s298 = sphi 0, %s300
      %s301 = sphi 0, %s298
      %s302 = sphi 0, %s301
      %s318 = sphi 0, %s302
    $region4: #{tpu_custom_call.1} parent=1 // loop_header_branch
      %24 = sbr.rel (%p22) target = $region8
    $region5: #{tpu_custom_call.1} parent=1 // loop_body
      %s26 = ssub.s32 %s21, 1
      %s27 = ssub.s32 %s21, 2
      %s28 = sadd.s32 %s21, 1
      %s29 = ssub.s32 %s21, %s28
      %p30 = scmp.eq.s32.totalorder %s29, 0
      %s32 = sadd.s32 %s31, 1
      %s33 = scalar_select %p30, %s31, %s32
      %p36 = pneg %p30
      %p37 = scmp.eq.s32.totalorder %s21, 1
      %p38 = por %p36, %p37
      %p39 = scmp.ne.s32.totalorder %s31, %s34
      %p40 = scmp.eq.s32.totalorder %s21, 0
      %p41 = por %p39, %p40
      %p42 = scmp.ne.s32.totalorder %s31, %s34
      %p43 = scmp.eq.s32.totalorder %s26, 1
      %p44 = por %p42, %p43
      %p45 = scmp.ne.s32.totalorder %s34, %s35
      %p46 = scmp.eq.s32.totalorder %s26, 0
      %p47 = por %p45, %p46
      %p48 = scmp.ne.s32.totalorder %s34, %s35
      %p49 = scmp.eq.s32.totalorder %s27, 1
      %p50 = por %p48, %p49
      %p52 = scmp.ne.s32.totalorder %s35, %s51
      %p53 = scmp.eq.s32.totalorder %s27, 0
      %p54 = por %p52, %p53
      %s55 = ssub.s32 %s21, %s28
      %p56 = scmp.eq.s32.totalorder %s55, 0
      %s58 = sadd.s32 %s57, 1
      %s59 = scalar_select %p56, %s57, %s58
      %p62 = pneg %p56
      %p63 = scmp.eq.s32.totalorder %s21, 1
      %p64 = por %p62, %p63
      %p65 = scmp.ne.s32.totalorder %s57, %s60
      %p66 = scmp.eq.s32.totalorder %s21, 0
      %p67 = por %p65, %p66
      %p68 = scmp.ne.s32.totalorder %s57, %s60
      %p69 = scmp.eq.s32.totalorder %s26, 1
      %p70 = por %p68, %p69
      %p71 = scmp.ne.s32.totalorder %s60, %s61
      %p72 = scmp.eq.s32.totalorder %s26, 0
      %p73 = por %p71, %p72
      %p74 = scmp.ne.s32.totalorder %s60, %s61
      %p75 = scmp.eq.s32.totalorder %s27, 1
      %p76 = por %p74, %p75
      %p78 = scmp.ne.s32.totalorder %s61, %s77
      %p79 = scmp.eq.s32.totalorder %s27, 0
      %p80 = por %p78, %p79
      %s81 = ssub.s32 %s21, %s28
      %p82 = scmp.eq.s32.totalorder %s81, 0
      %s84 = sadd.s32 %s83, 1
      %s85 = scalar_select %p82, %s83, %s84
      %p88 = pneg %p82
      %p89 = scmp.eq.s32.totalorder %s21, 1
      %p90 = por %p88, %p89
      %p91 = scmp.ne.s32.totalorder %s83, %s86
      %p92 = scmp.eq.s32.totalorder %s21, 0
      %p93 = por %p91, %p92
      %p94 = scmp.ne.s32.totalorder %s83, %s86
      %p95 = scmp.eq.s32.totalorder %s26, 1
      %p96 = por %p94, %p95
      %p97 = scmp.ne.s32.totalorder %s86, %s87
      %p98 = scmp.eq.s32.totalorder %s26, 0
      %p99 = por %p97, %p98
      %p100 = scmp.ne.s32.totalorder %s86, %s87
      %p101 = scmp.eq.s32.totalorder %s27, 1
      %p102 = por %p100, %p101
      %p104 = scmp.ne.s32.totalorder %s87, %s103
      %p105 = scmp.eq.s32.totalorder %s27, 0
      %p106 = por %p104, %p105
      %s108 = sadd.s32 %s107, 1
      %p111 = scmp.eq.s32.totalorder %s21, 1
      %p112 = scmp.ne.s32.totalorder %s107, %s109
      %p113 = scmp.eq.s32.totalorder %s21, 0
      %p114 = por %p112, %p113
      %p115 = scmp.ne.s32.totalorder %s107, %s109
      %p116 = scmp.eq.s32.totalorder %s26, 1
      %p117 = por %p115, %p116
      %p118 = scmp.ne.s32.totalorder %s109, %s110
      %p119 = scmp.eq.s32.totalorder %s26, 0
      %p120 = por %p118, %p119
      %p121 = scmp.ne.s32.totalorder %s109, %s110
      %p122 = scmp.eq.s32.totalorder %s27, 1
      %p123 = por %p121, %p122
      %p125 = scmp.ne.s32.totalorder %s110, %s124
      %p126 = scmp.eq.s32.totalorder %s27, 0
      %p127 = por %p125, %p126
      %s129 = sadd.s32 %s128, 1
      %p132 = scmp.eq.s32.totalorder %s21, 1
      %p133 = scmp.ne.s32.totalorder %s128, %s130
      %p134 = scmp.eq.s32.totalorder %s21, 0
      %p135 = por %p133, %p134
      %p136 = scmp.ne.s32.totalorder %s128, %s130
      %p137 = scmp.eq.s32.totalorder %s26, 1
      %p138 = por %p136, %p137
      %p139 = scmp.ne.s32.totalorder %s130, %s131
      %p140 = scmp.eq.s32.totalorder %s26, 0
      %p141 = por %p139, %p140
      %p142 = scmp.ne.s32.totalorder %s130, %s131
      %p143 = scmp.eq.s32.totalorder %s27, 1
      %p144 = por %p142, %p143
      %p146 = scmp.ne.s32.totalorder %s131, %s145
      %p147 = scmp.eq.s32.totalorder %s27, 0
      %p148 = por %p146, %p147
      %s150 = sadd.s32 %s149, 1
      %p153 = scmp.eq.s32.totalorder %s21, 1
      %p154 = scmp.ne.s32.totalorder %s149, %s151
      %p155 = scmp.eq.s32.totalorder %s21, 0
      %p156 = por %p154, %p155
      %p157 = scmp.ne.s32.totalorder %s149, %s151
      %p158 = scmp.eq.s32.totalorder %s26, 1
      %p159 = por %p157, %p158
      %p160 = scmp.ne.s32.totalorder %s151, %s152
      %p161 = scmp.eq.s32.totalorder %s26, 0
      %p162 = por %p160, %p161
      %p163 = scmp.ne.s32.totalorder %s151, %s152
      %p164 = scmp.eq.s32.totalorder %s27, 1
      %p165 = por %p163, %p164
      %p167 = scmp.ne.s32.totalorder %s152, %s166
      %p168 = scmp.eq.s32.totalorder %s27, 0
      %p169 = por %p167, %p168
      %s171 = sadd.s32 %s170, 1
      %p174 = scmp.eq.s32.totalorder %s21, 1
      %p175 = scmp.ne.s32.totalorder %s170, %s172
      %p176 = scmp.eq.s32.totalorder %s21, 0
      %p177 = por %p175, %p176
      %p178 = scmp.ne.s32.totalorder %s170, %s172
      %p179 = scmp.eq.s32.totalorder %s26, 1
      %p180 = por %p178, %p179
      %p181 = scmp.ne.s32.totalorder %s172, %s173
      %p182 = scmp.eq.s32.totalorder %s26, 0
      %p183 = por %p181, %p182
      %p184 = scmp.ne.s32.totalorder %s172, %s173
      %p185 = scmp.eq.s32.totalorder %s27, 1
      %p186 = por %p184, %p185
      %p188 = scmp.ne.s32.totalorder %s173, %s187
      %p189 = scmp.eq.s32.totalorder %s27, 0
      %p190 = por %p188, %p189
      %s192 = sadd.s32 %s191, 1
      %p195 = scmp.eq.s32.totalorder %s21, 1
      %p196 = scmp.ne.s32.totalorder %s191, %s193
      %p197 = scmp.eq.s32.totalorder %s21, 0
      %p198 = por %p196, %p197
      %p199 = scmp.ne.s32.totalorder %s191, %s193
      %p200 = scmp.eq.s32.totalorder %s26, 1
      %p201 = por %p199, %p200
      %p202 = scmp.ne.s32.totalorder %s193, %s194
      %p203 = scmp.eq.s32.totalorder %s26, 0
      %p204 = por %p202, %p203
      %p205 = scmp.ne.s32.totalorder %s193, %s194
      %p206 = scmp.eq.s32.totalorder %s27, 1
      %p207 = por %p205, %p206
      %p209 = scmp.ne.s32.totalorder %s194, %s208
      %p210 = scmp.eq.s32.totalorder %s27, 0
      %p211 = por %p209, %p210
      %s213 = sadd.s32 %s212, 1
      %p216 = scmp.eq.s32.totalorder %s21, 1
      %p217 = scmp.ne.s32.totalorder %s212, %s214
      %p218 = scmp.eq.s32.totalorder %s21, 0
      %p219 = por %p217, %p218
      %p220 = scmp.ne.s32.totalorder %s212, %s214
      %p221 = scmp.eq.s32.totalorder %s26, 1
      %p222 = por %p220, %p221
      %p223 = scmp.ne.s32.totalorder %s214, %s215
      %p224 = scmp.eq.s32.totalorder %s26, 0
      %p225 = por %p223, %p224
      %p226 = scmp.ne.s32.totalorder %s214, %s215
      %p227 = scmp.eq.s32.totalorder %s27, 1
      %p228 = por %p226, %p227
      %p230 = scmp.ne.s32.totalorder %s215, %s229
      %p231 = scmp.eq.s32.totalorder %s27, 0
      %p232 = por %p230, %p231
      %s234 = sadd.s32 %s233, 1
      %p237 = scmp.eq.s32.totalorder %s21, 1
      %p238 = scmp.ne.s32.totalorder %s233, %s235
      %p239 = scmp.eq.s32.totalorder %s21, 0
      %p240 = por %p238, %p239
      %p241 = scmp.ne.s32.totalorder %s233, %s235
      %p242 = scmp.eq.s32.totalorder %s26, 1
      %p243 = por %p241, %p242
      %p244 = scmp.ne.s32.totalorder %s235, %s236
      %p245 = scmp.eq.s32.totalorder %s26, 0
      %p246 = por %p244, %p245
      %p247 = scmp.ne.s32.totalorder %s235, %s236
      %p248 = scmp.eq.s32.totalorder %s27, 1
      %p249 = por %p247, %p248
      %p251 = scmp.ne.s32.totalorder %s236, %s250
      %p252 = scmp.eq.s32.totalorder %s27, 0
      %p253 = por %p251, %p252
      %s255 = sadd.s32 %s254, 1
      %p258 = scmp.eq.s32.totalorder %s21, 1
      %p259 = scmp.ne.s32.totalorder %s254, %s256
      %p260 = scmp.eq.s32.totalorder %s21, 0
      %p261 = por %p259, %p260
      %p262 = scmp.ne.s32.totalorder %s254, %s256
      %p263 = scmp.eq.s32.totalorder %s26, 1
      %p264 = por %p262, %p263
      %p265 = scmp.ne.s32.totalorder %s256, %s257
      %p266 = scmp.eq.s32.totalorder %s26, 0
      %p267 = por %p265, %p266
      %p268 = scmp.ne.s32.totalorder %s256, %s257
      %p269 = scmp.eq.s32.totalorder %s27, 1
      %p270 = por %p268, %p269
      %p272 = scmp.ne.s32.totalorder %s257, %s271
      %p273 = scmp.eq.s32.totalorder %s27, 0
      %p274 = por %p272, %p273
      %s276 = sadd.s32 %s275, 1
      %p279 = scmp.eq.s32.totalorder %s21, 1
      %p280 = scmp.ne.s32.totalorder %s275, %s277
      %p281 = scmp.eq.s32.totalorder %s21, 0
      %p282 = por %p280, %p281
      %p283 = scmp.ne.s32.totalorder %s275, %s277
      %p284 = scmp.eq.s32.totalorder %s26, 1
      %p285 = por %p283, %p284
      %p286 = scmp.ne.s32.totalorder %s277, %s278
      %p287 = scmp.eq.s32.totalorder %s26, 0
      %p288 = por %p286, %p287
      %p289 = scmp.ne.s32.totalorder %s277, %s278
      %p290 = scmp.eq.s32.totalorder %s27, 1
      %p291 = por %p289, %p290
      %p293 = scmp.ne.s32.totalorder %s278, %s292
      %p294 = scmp.eq.s32.totalorder %s27, 0
      %p295 = por %p293, %p294
      %s296 = ssub.s32 %s21, %s28
      %p297 = scmp.eq.s32.totalorder %s296, 0
      %s299 = sadd.s32 %s298, 1
      %s300 = scalar_select %p297, %s298, %s299
      %p303 = pneg %p297
      %p304 = scmp.eq.s32.totalorder %s21, 1
      %p305 = por %p303, %p304
      %p306 = scmp.ne.s32.totalorder %s298, %s301
      %p307 = scmp.eq.s32.totalorder %s21, 0
      %p308 = por %p306, %p307
      %p309 = scmp.ne.s32.totalorder %s298, %s301
      %p310 = scmp.eq.s32.totalorder %s26, 1
      %p311 = por %p309, %p310
      %p312 = scmp.ne.s32.totalorder %s301, %s302
      %p313 = scmp.eq.s32.totalorder %s26, 0
      %p314 = por %p312, %p313
      %p315 = scmp.ne.s32.totalorder %s301, %s302
      %p316 = scmp.eq.s32.totalorder %s27, 1
      %p317 = por %p315, %p316
      %p319 = scmp.ne.s32.totalorder %s302, %s318
      %p320 = scmp.eq.s32.totalorder %s27, 0
      %p321 = por %p319, %p320
      %p322 = scmp.le.s32.totalorder 1, %s21
      %p323 = scmp.lt.s32.totalorder %s21, 3
      %p324 = pnand %p322, %p323
      %p325 = pneg %p324
      // Predicated region
      $region9: #{tpu_custom_call.1} parent=5 // pred_check
        _
      $region10: #{tpu_custom_call.1} parent=5 // pred_check_branch
        %327 = sbr.rel (%p324) target = $region12
      $region11: #{tpu_custom_call.1} parent=5 // pred_region
        %s328 = ssub.s32 %s21, 1
        // Predicated region
        $region13: #{tpu_custom_call.1} parent=11 // pred_check
          %p329 = pneg %p120
        $region14: #{tpu_custom_call.1} parent=11 // pred_check_branch
          %331 = sbr.rel (%p329) target = $region16
        $region15: #{tpu_custom_call.1} parent=11 // pred_region
          _
        $region16: #{tpu_custom_call.1} parent=11 // pred_fallthru
          _
        // Predicated region
        $region17: #{tpu_custom_call.1} parent=11 // pred_check
          %p332 = pneg %p141
        $region18: #{tpu_custom_call.1} parent=11 // pred_check_branch
          %334 = sbr.rel (%p332) target = $region20
        $region19: #{tpu_custom_call.1} parent=11 // pred_region
          _
        $region20: #{tpu_custom_call.1} parent=11 // pred_fallthru
          _
        // Predicated region
        $region21: #{tpu_custom_call.1} parent=11 // pred_check
          %p335 = pneg %p162
        $region22: #{tpu_custom_call.1} parent=11 // pred_check_branch
          %337 = sbr.rel (%p335) target = $region24
        $region23: #{tpu_custom_call.1} parent=11 // pred_region
          _
        $region24: #{tpu_custom_call.1} parent=11 // pred_fallthru
          _
        // Predicated region
        $region25: #{tpu_custom_call.1} parent=11 // pred_check
          %p338 = pneg %p183
        $region26: #{tpu_custom_call.1} parent=11 // pred_check_branch
          %340 = sbr.rel (%p338) target = $region28
        $region27: #{tpu_custom_call.1} parent=11 // pred_region
          _
        $region28: #{tpu_custom_call.1} parent=11 // pred_fallthru
          _
        // Predicated region
        $region29: #{tpu_custom_call.1} parent=11 // pred_check
          %p341 = pneg %p204
        $region30: #{tpu_custom_call.1} parent=11 // pred_check_branch
          %343 = sbr.rel (%p341) target = $region32
        $region31: #{tpu_custom_call.1} parent=11 // pred_region
          _
        $region32: #{tpu_custom_call.1} parent=11 // pred_fallthru
          _
        // Predicated region
        $region33: #{tpu_custom_call.1} parent=11 // pred_check
          %p344 = pneg %p225
        $region34: #{tpu_custom_call.1} parent=11 // pred_check_branch
          %346 = sbr.rel (%p344) target = $region36
        $region35: #{tpu_custom_call.1} parent=11 // pred_region
          _
        $region36: #{tpu_custom_call.1} parent=11 // pred_fallthru
          _
        // Predicated region
        $region37: #{tpu_custom_call.1} parent=11 // pred_check
          %p347 = pneg %p246
        $region38: #{tpu_custom_call.1} parent=11 // pred_check_branch
          %349 = sbr.rel (%p347) target = $region40
        $region39: #{tpu_custom_call.1} parent=11 // pred_region
          _
        $region40: #{tpu_custom_call.1} parent=11 // pred_fallthru
          _
        // Predicated region
        $region41: #{tpu_custom_call.1} parent=11 // pred_check
          %p350 = pneg %p267
        $region42: #{tpu_custom_call.1} parent=11 // pred_check_branch
          %352 = sbr.rel (%p350) target = $region44
        $region43: #{tpu_custom_call.1} parent=11 // pred_region
          _
        $region44: #{tpu_custom_call.1} parent=11 // pred_fallthru
          _
        // Predicated region
        $region45: #{tpu_custom_call.1} parent=11 // pred_check
          %p353 = pneg %p288
        $region46: #{tpu_custom_call.1} parent=11 // pred_check_branch
          %355 = sbr.rel (%p353) target = $region48
        $region47: #{tpu_custom_call.1} parent=11 // pred_region
          _
        $region48: #{tpu_custom_call.1} parent=11 // pred_fallthru
          _
      $region12: #{tpu_custom_call.1} parent=5 // pred_fallthru
        _
      %p356 = scmp.lt.s32.totalorder %s21, 2
      // Predicated region
      $region49: #{tpu_custom_call.1} parent=5 // pred_check
        %p357 = pneg %p356
      $region50: #{tpu_custom_call.1} parent=5 // pred_check_branch
        %359 = sbr.rel (%p357) target = $region52
      $region51: #{tpu_custom_call.1} parent=5 // pred_region
        // Predicated region
        $region53: #{tpu_custom_call.1} parent=51 // pred_check
          %p360 = pneg %p41
        $region54: #{tpu_custom_call.1} parent=51 // pred_check_branch
          %362 = sbr.rel (%p360) target = $region56
        $region55: #{tpu_custom_call.1} parent=51 // pred_region
          %p363 = scmp.lt.s32.totalorder %s21, 1
          %s364 = scalar_select %p363, %s21, 1
          %s365 = smul.addr %s364, 8
          %s366 = scalar_lea.vmem %s0, %s365
        $region56: #{tpu_custom_call.1} parent=51 // pred_fallthru
          _
        // Predicated region
        $region57: #{tpu_custom_call.1} parent=51 // pred_check
          %p367 = pneg %p67
        $region58: #{tpu_custom_call.1} parent=51 // pred_check_branch
          %369 = sbr.rel (%p367) target = $region60
        $region59: #{tpu_custom_call.1} parent=51 // pred_region
          %p370 = scmp.lt.s32.totalorder %s21, 1
          %s371 = scalar_select %p370, %s21, 1
          %s372 = smul.addr %s371, 8
          %s373 = scalar_lea.vmem %s1, %s372
        $region60: #{tpu_custom_call.1} parent=51 // pred_fallthru
          _
        // Predicated region
        $region61: #{tpu_custom_call.1} parent=51 // pred_check
          %p374 = pneg %p93
        $region62: #{tpu_custom_call.1} parent=51 // pred_check_branch
          %376 = sbr.rel (%p374) target = $region64
        $region63: #{tpu_custom_call.1} parent=51 // pred_region
          %p377 = scmp.lt.s32.totalorder %s21, 1
          %s378 = scalar_select %p377, %s21, 1
          %s379 = scalar_lea.vmem %s2, %s378
        $region64: #{tpu_custom_call.1} parent=51 // pred_fallthru
          _
      $region52: #{tpu_custom_call.1} parent=5 // pred_fallthru
        _
      %p380 = scmp.le.s32.totalorder 1, %s21
      %p381 = scmp.lt.s32.totalorder %s21, 3
      %p382 = pnand %p380, %p381
      %p383 = pneg %p382
      // Predicated region
      $region65: #{tpu_custom_call.1} parent=5 // pred_check
        _
      $region66: #{tpu_custom_call.1} parent=5 // pred_check_branch
        %385 = sbr.rel (%p382) target = $region68
      $region67: #{tpu_custom_call.1} parent=5 // pred_region
        %s386 = ssub.s32 %s21, 1
        %p387 = scmp.lt.s32.totalorder %s26, 1
        %s388 = scalar_select %p387, %s26, 1
        %s389 = smul.addr %s388, 8
        %s390 = scalar_lea.vmem %s0, %s389
        %p391 = pneg %p47
        %p392 = pneg %p44
        %p393 = scmp.lt.s32.totalorder %s26, 1
        %s394 = scalar_select %p393, %s26, 1
        %s395 = smul.addr %s394, 8
        %s396 = scalar_lea.vmem %s1, %s395
        %p397 = pneg %p73
        %p398 = pneg %p70
        %p399 = scmp.lt.s32.totalorder %s26, 1
        %s400 = scalar_select %p399, %s26, 1
        %s401 = scalar_lea.vmem %s2, %s400
        %p402 = pneg %p99
        %p403 = pneg %p96
        %p404 = pneg %p120
        %p405 = pneg %p117
        %p406 = pneg %p141
        %p407 = pneg %p138
        %p408 = pneg %p162
        %p409 = pneg %p159
        %p410 = pneg %p183
        %p411 = pneg %p180
        %p412 = pneg %p204
        %p413 = pneg %p201
        %p414 = pneg %p225
        %p415 = pneg %p222
        %p416 = pneg %p246
        %p417 = pneg %p243
        %p418 = pneg %p267
        %p419 = pneg %p264
        %p420 = pneg %p288
        %p421 = pneg %p285
        %p422 = pneg %p314
        %p423 = pneg %p311
        %s424 = sand.u32 %s301, 1
        %s425 = scalar_lea.sflag [#allocation3], %s424
        %s426 = sand.u32 %s301, 1
        %s427 = scalar_lea.vmem [#allocation2], %s426
        %p428 = scmp.lt.s32.totalorder %s26, 1
        %s429 = scalar_select %p428, %s26, 1
        %s430 = smul.addr %s429, 8
        %s431 = scalar_lea.vmem %s0, %s430
        %p432 = scmp.lt.s32.totalorder %s26, 1
        %s433 = scalar_select %p432, %s26, 1
        %s434 = smul.addr %s433, 8
        %s435 = scalar_lea.vmem %s1, %s434
        %p436 = scmp.lt.s32.totalorder %s26, 1
        %s437 = scalar_select %p436, %s26, 1
        %s438 = scalar_lea.vmem %s2, %s437
        %v439 = vld [vmem:[%s435] sm:$0xff]
        %v440 = vld [vmem:[%s431] sm:$0xff]
        %v441 = vld [vmem:[%s3] sm:$0xf]
        %vm442 = vcmask 64512
        %v444 = vsel %vm442, %v439, 0
        %446 = vmatpush.msra.mxu0 0.0
        %447 = vmatpush.msra.mxu0 0.0
        %448 = vmatpush.msra.mxu0 0.0
        %449 = vmatpush.msra.mxu0 0.0
        %450 = vmatpush.msra.mxu0 0.0
        %451 = vmatpush.msra.mxu0 0.0
        %452 = vmatpush.msra.mxu0 0.0
        %453 = vmatpush.msra.mxu0 0.0
        %454 = vmatpush.msra.mxu0 0.0
        %455 = vmatpush.msra.mxu0 0.0
        %456 = vmatpush.msra.mxu0 0.0
        %457 = vmatpush.msra.mxu0 0.0
        %458 = vmatpush.msra.mxu0 0.0
        %459 = vmatpush.msra.mxu0 0.0
        %460 = vmatpush.msra.mxu0 0.0
        %461 = vmatpush.msra.mxu0 %v440
        %462 = vmatmul.f32.gmra.mxu0 %v444
        %v463 = vpop.f32.mrf.mxu0
        %v464 = vadd.f32 0.0, %v463
        %465 = vdwg.mxu0
        %v466 = vld [vmem:[%s4] sm:$0x1]
        %v468 = vperm.slane %v466, 0
        %vm470 = vcmask 31744
        %v472 = vsel %vm470, %v464, 0
        %vm474 = vcmask 1043456
        %v476 = vsel %vm474, %v441, 0
        %478 = vmatpush.msra.mxu0 0.0
        %479 = vmatpush.msra.mxu0 0.0
        %480 = vmatpush.msra.mxu0 0.0
        %481 = vmatpush.msra.mxu0 0.0
        %482 = vmatpush.msra.mxu0 0.0
        %483 = vmatpush.msra.mxu0 0.0
        %484 = vmatpush.msra.mxu0 0.0
        %485 = vmatpush.msra.mxu0 0.0
        %486 = vmatpush.msra.mxu0 0.0
        %487 = vmatpush.msra.mxu0 0.0
        %488 = vmatpush.msra.mxu0 0.0
        %489 = vmatpush.msra.mxu0 0.0
        %490 = vmatpush.msra.mxu0 0.0
        %491 = vmatpush.msra.mxu0 0.0
        %492 = vmatpush.msra.mxu0 0.0
        %493 = vmatpush.msra.mxu0 %v476
        %494 = vmatmul.f32.gmra.mxu0 %v472
        %v495 = vpop.f32.mrf.mxu0
        %v496 = vadd.f32 %v468, %v495
        %497 = vdwg.mxu0
        %v498 = vmax.f32 %v496, 0.0
        %v499 = vld [vmem:[%s5] sm:$0xff]
        %v500 = vld [vmem:[%s5 + $0x8] sm:$0xff]
        %vm501 = vcmask 130048
        %v503 = vsel %vm501, %v498, 0
        %505 = vmatpush.msra.mxu0 0.0
        %506 = vmatpush.msra.mxu0 0.0
        %507 = vmatpush.msra.mxu0 0.0
        %508 = vmatpush.msra.mxu0 0.0
        %509 = vmatpush.msra.mxu0 0.0
        %510 = vmatpush.msra.mxu0 0.0
        %511 = vmatpush.msra.mxu0 0.0
        %512 = vmatpush.msra.mxu0 0.0
        %513 = vmatpush.msra.mxu0 0.0
        %514 = vmatpush.msra.mxu0 0.0
        %515 = vmatpush.msra.mxu0 0.0
        %516 = vmatpush.msra.mxu0 0.0
        %517 = vmatpush.msra.mxu0 0.0
        %518 = vmatpush.msra.mxu0 0.0
        %519 = vmatpush.msra.mxu0 %v500
        %520 = vmatpush.msra.mxu0 %v499
        %521 = vmatmul.f32.gmra.mxu0 %v503
        %v522 = vpop.f32.mrf.mxu0
        %v523 = vadd.f32 0.0, %v522
        %524 = vdwg.mxu0
        %v525 = vld [vmem:[%s6] sm:$0x1]
        %v527 = vperm.slane %v525, 0
        %529 = vmatpush.msra.mxu0 0.0
        %530 = vmatpush.msra.mxu0 0.0
        %531 = vmatpush.msra.mxu0 0.0
        %532 = vmatpush.msra.mxu0 0.0
        %533 = vmatpush.msra.mxu0 0.0
        %534 = vmatpush.msra.mxu0 0.0
        %535 = vmatpush.msra.mxu0 0.0
        %536 = vmatpush.msra.mxu0 0.0
        %537 = vmatpush.msra.mxu0 0.0
        %538 = vmatpush.msra.mxu0 0.0
        %539 = vmatpush.msra.mxu0 0.0
        %540 = vmatpush.msra.mxu0 0.0
        %541 = vmatpush.msra.mxu0 0.0
        %542 = vmatpush.msra.mxu0 0.0
        %543 = vmatpush.msra.mxu0 0.0
        %544 = vmatpush.msra.mxu0 %v523
        %545 = vmatmul.f32.gmra.mxu0 %v444
        %v546 = vpop.f32.mrf.mxu0
        %v547 = vadd.f32 %v527, %v546
        %548 = vdwg.mxu0
        %v549 = vmax.f32 %v547, 0.0
        %v551 = vrot.slane %v549, 1
        %552 = vrot.lane.b32.xlu0 %v551, 8
        %v553 = vpop.permute.xlu0 %552
        %v555 = vrot.slane %v549, 2
        %556 = vrot.lane.b32.xlu0 %v555, 16
        %v557 = vpop.permute.xlu0 %556
        %v559 = vrot.slane %v549, 3
        %560 = vrot.lane.b32.xlu0 %v559, 24
        %v561 = vpop.permute.xlu0 %560
        %v563 = vrot.slane %v549, 4
        %564 = vrot.lane.b32.xlu0 %v563, 32
        %v565 = vpop.permute.xlu0 %564
        %v567 = vrot.slane %v549, 5
        %568 = vrot.lane.b32.xlu0 %v567, 40
        %v569 = vpop.permute.xlu0 %568
        %v571 = vrot.slane %v549, 6
        %572 = vrot.lane.b32.xlu0 %v571, 48
        %v573 = vpop.permute.xlu0 %572
        %v575 = vrot.slane %v549, 7
        %576 = vrot.lane.b32.xlu0 %v575, 56
        %v577 = vpop.permute.xlu0 %576
        %v579 = vsel %vm442, %v549, %v553
        %v580 = vsel %vm501, %v579, %v557
        %vm581 = vcmask 195584
        %v582 = vsel %vm581, %v580, %v561
        %vm583 = vcmask 261120
        %v584 = vsel %vm583, %v582, %v565
        %vm585 = vcmask 326656
        %v586 = vsel %vm585, %v584, %v569
        %vm587 = vcmask 392192
        %v588 = vsel %vm587, %v586, %v573
        %vm589 = vcmask 457728
        %v590 = vsel %vm589, %v588, %v577
        %v591 = vld [vmem:[%s7] sm:$0xff]
        %v592 = vld [vmem:[%s7 + $0x8] sm:$0xff]
        %v593 = vld [vmem:[%s7 + $0x10] sm:$0xff]
        %v594 = vld [vmem:[%s7 + $0x18] sm:$0xff]
        %v595 = vld [vmem:[%s7 + $0x20] sm:$0xff]
        %v596 = vld [vmem:[%s7 + $0x28] sm:$0xff]
        %v597 = vld [vmem:[%s7 + $0x30] sm:$0xff]
        %v598 = vld [vmem:[%s7 + $0x38] sm:$0xff]
        %v599 = vld [vmem:[%s438] sm:$0x1]
        %v600 = vld [vmem:[%s8] sm:$0xff]
        %v601 = vld [vmem:[%s8 + $0x8] sm:$0xff]
        %v603 = vsel %vm501, %v599, 0
        %605 = vmatpush.msra.mxu0 0.0
        %606 = vmatpush.msra.mxu0 0.0
        %607 = vmatpush.msra.mxu0 0.0
        %608 = vmatpush.msra.mxu0 0.0
        %609 = vmatpush.msra.mxu0 0.0
        %610 = vmatpush.msra.mxu0 0.0
        %611 = vmatpush.msra.mxu0 0.0
        %612 = vmatpush.msra.mxu0 0.0
        %613 = vmatpush.msra.mxu0 0.0
        %614 = vmatpush.msra.mxu0 0.0
        %615 = vmatpush.msra.mxu0 0.0
        %616 = vmatpush.msra.mxu0 0.0
        %617 = vmatpush.msra.mxu0 0.0
        %618 = vmatpush.msra.mxu0 0.0
        %619 = vmatpush.msra.mxu0 %v601
        %620 = vmatpush.msra.mxu0 %v600
        %621 = vmatmul.f32.gmra.mxu0 %v603
        %v622 = vpop.f32.mrf.mxu0
        %v623 = vadd.f32 0.0, %v622
        %624 = vdwg.mxu0
        %vm625 = vcmask 523264
        %v627 = vsel %vm625, %v590, 0
        %629 = vmatpush.msra.mxu0 0.0
        %630 = vmatpush.msra.mxu0 0.0
        %631 = vmatpush.msra.mxu0 0.0
        %632 = vmatpush.msra.mxu0 0.0
        %633 = vmatpush.msra.mxu0 0.0
        %634 = vmatpush.msra.mxu0 0.0
        %635 = vmatpush.msra.mxu0 0.0
        %636 = vmatpush.msra.mxu0 0.0
        %637 = vmatpush.msra.mxu0 %v598
        %638 = vmatpush.msra.mxu0 %v597
        %639 = vmatpush.msra.mxu0 %v596
        %640 = vmatpush.msra.mxu0 %v595
        %641 = vmatpush.msra.mxu0 %v594
        %642 = vmatpush.msra.mxu0 %v593
        %643 = vmatpush.msra.mxu0 %v592
        %644 = vmatpush.msra.mxu0 %v591
        %645 = vmatmul.f32.gmra.mxu0 %v627
        %v646 = vpop.f32.mrf.mxu0
        %v647 = vadd.f32 %v623, %v646
        %648 = vdwg.mxu0
        %v649 = vld [vmem:[%s9] sm:$0x1]
        %v650 = vadd.f32 %v647, %v649
        %v651 = vtanh.pop %v650
        %v652 = vld [vmem:[%s10] sm:$0xff]
        %v653 = vld [vmem:[%s10 + $0x8] sm:$0xff]
        %v654 = vld [vmem:[%s10 + $0x10] sm:$0xff]
        %v655 = vld [vmem:[%s10 + $0x18] sm:$0xff]
        %v656 = vld [vmem:[%s11] sm:$0x1]
        %v658 = vsel %vm583, %v651, 0
        %660 = vmatpush.msra.mxu0 0.0
        %661 = vmatpush.msra.mxu0 0.0
        %662 = vmatpush.msra.mxu0 0.0
        %663 = vmatpush.msra.mxu0 0.0
        %664 = vmatpush.msra.mxu0 0.0
        %665 = vmatpush.msra.mxu0 0.0
        %666 = vmatpush.msra.mxu0 0.0
        %667 = vmatpush.msra.mxu0 0.0
        %668 = vmatpush.msra.mxu0 0.0
        %669 = vmatpush.msra.mxu0 0.0
        %670 = vmatpush.msra.mxu0 0.0
        %671 = vmatpush.msra.mxu0 0.0
        %672 = vmatpush.msra.mxu0 %v655
        %673 = vmatpush.msra.mxu0 %v654
        %674 = vmatpush.msra.mxu0 %v653
        %675 = vmatpush.msra.mxu0 %v652
        %676 = vmatmul.f32.gmra.mxu0 %v658
        %v677 = vpop.f32.mrf.mxu0
        %v678 = vadd.f32 %v656, %v677
        %679 = vdwg.mxu0
        %vm680 = vcmask 24576
        %681 = vst.msk [vmem:[%s427] sm:$0x1] %vm680, %v678
        %s682 = sand.u32 %s301, 1
        %s683 = scalar_lea.sflag [#allocation3], %s682
        %s684 = sand.u32 %s301, 1
        %s685 = scalar_lea.vmem [#allocation2], %s684
        // Predicated region
        $region69: #{tpu_custom_call.1} parent=67 // pred_check
          %p686 = pneg %p311
        $region70: #{tpu_custom_call.1} parent=67 // pred_check_branch
          %688 = sbr.rel (%p686) target = $region72
        $region71: #{tpu_custom_call.1} parent=67 // pred_region
          %690 = vsyncadd %s683, 0
          %s691 = scalar_lea.hbm %s12, %s26
          %s693 = sshll.u32 %s685, 4
          %s694 = int_to_ptr.vmem [resolvable:$true] %s693
          %s695 = sshll.u32 %s691, 4
          %s696 = int_to_ptr.hbm [resolvable:$true] %s695
          %698 = dma.vmem_to_hbm [thread:$0]  %s694, 16, %s696, %s683
        $region72: #{tpu_custom_call.1} parent=67 // pred_fallthru
          _
      $region68: #{tpu_custom_call.1} parent=5 // pred_fallthru
        _
      %p699 = scmp.le.s32.totalorder 2, %s21
      // Predicated region
      $region73: #{tpu_custom_call.1} parent=5 // pred_check
        %p700 = pneg %p699
      $region74: #{tpu_custom_call.1} parent=5 // pred_check_branch
        %702 = sbr.rel (%p700) target = $region76
      $region75: #{tpu_custom_call.1} parent=5 // pred_region
        %s703 = ssub.s32 %s21, 2
        // Predicated region
        $region77: #{tpu_custom_call.1} parent=75 // pred_check
          %p704 = pneg %p317
        $region78: #{tpu_custom_call.1} parent=75 // pred_check_branch
          %706 = sbr.rel (%p704) target = $region80
        $region79: #{tpu_custom_call.1} parent=75 // pred_region
          %s707 = sand.u32 %s302, 1
          %s708 = scalar_lea.sflag [#allocation3], %s707
          %s709 = sand.u32 %s302, 1
          %s710 = scalar_lea.vmem [#allocation2], %s709
          %712 = dma.done %s708, 16
        $region80: #{tpu_custom_call.1} parent=75 // pred_fallthru
          _
      $region76: #{tpu_custom_call.1} parent=5 // pred_fallthru
        _
    $region6: #{tpu_custom_call.1} parent=1 // loop_footer
      %s25 = sadd.s32 1, %s21
    $region7: #{tpu_custom_call.1} parent=1 // loop_footer_branch
      %20 = sbr.rel target = $region3
    $region8: #{tpu_custom_call.1} parent=1 // loop_exit
      _
    %713 = vsyncpa [#allocation3], 1
    %s714 = scalar_lea.sflag [#allocation3], 1
    %715 = vsyncpa %s714, 1

</llo_original>
